<compile_context>
chip_gen: v6e
topology: v6e:2x2x1
jax: 0.10.0
libtpu: 0.0.40
codegen_flags: <defaults>
</compile_context>

<pallas_src>
import numpy as np
import jax
import jax.numpy as jnp
from jax.experimental import pallas as pl
from jax.experimental.pallas import tpu as pltpu

# Small shapes consistent with the module's forward (b, c, t, h, w)
B, C, T_FRAMES, H, W_SP = 2, 4, 8, 16, 16
M = T_FRAMES * H * W_SP                # 2048, multiple of 128 -> lane dense
BC = B * C                             # 8 -> full sublane packing
NUM_TIMESTEPS = 50


def _diffusion_loss_kernel(x_ref, noise_ref, coef_ref, loss_ref):
    """x_ref/noise_ref: (BC, M) VMEM; coef_ref: (BC, BC+5) VMEM; loss_ref: (1,1) SMEM."""
    x = x_ref[...]                      # (BC, M)
    noise = noise_ref[...]              # (BC, M)
    coef = coef_ref[...]                # (BC, BC+5) -- tiny, single load

    wexp   = coef[:, 0:BC]              # block-diag weight: wexp[r,s]=W[r%C,s%C] iff same batch
    ca     = coef[:, BC + 0:BC + 1]     # extract(sqrt_alphas_cumprod, t)           per row
    cb     = coef[:, BC + 1:BC + 2]     # extract(sqrt_one_minus_alphas_cumprod, t) per row
    bias   = coef[:, BC + 2:BC + 3]     # model bias per row (= bias[r % C])
    temb   = coef[:, BC + 3:BC + 4]     # time-embedding weight per row
    t_norm = coef[:, BC + 4:BC + 5]     # t / num_timesteps per row

    # perturb_x: forward diffusion q(x_t | x_0), full-vreg elementwise.
    perturbed = ca * x + cb * noise     # (BC, M)

    # Synthetic denoiser eps^ = W @ x_t + bias + temb * t_norm, done as an
    # unrolled VPU outer-product sum (no MXU): est[r,:] = sum_s wexp[r,s]*p[s,:].
    est = wexp[:, 0:1] * perturbed[0:1, :]
    for s in range(1, BC):
        est = est + wexp[:, s:s + 1] * perturbed[s:s + 1, :]
    est = est + bias + temb * t_norm    # (BC, M)

    # l2 loss: one cross-lane/sublane reduction + one scalar SMEM store.
    diff = est - noise
    loss_ref[0, 0] = jnp.sum(diff * diff) * jnp.float32(1.0 / (BC * M))


def gaussian_diffusion_loss(x, noise, t, sqrt_ac, sqrt_1mac, w, bias, temb):
    """x, noise: (B, C, T, H, W) f32; t: (B,) i32; tables: (num_timesteps,) f32;
    w: (C, C); bias, temb: (C, 1)."""
    x2 = x.reshape(BC, M)
    n2 = noise.reshape(BC, M)

    # Tiny per-row coefficient block (8 x 13): table extract + parameter tiling.
    ca_col   = jnp.repeat(sqrt_ac[t], C)[:, None]                        # (BC, 1)
    cb_col   = jnp.repeat(sqrt_1mac[t], C)[:, None]
    tn_col   = jnp.repeat(t.astype(jnp.float32) / NUM_TIMESTEPS, C)[:, None]
    bias_col = jnp.tile(bias.reshape(-1), B)[:, None]
    temb_col = jnp.tile(temb.reshape(-1), B)[:, None]
    wexp     = jnp.kron(jnp.eye(B, dtype=w.dtype), w)                    # (BC, BC) block-diag
    coef = jnp.concatenate([wexp, ca_col, cb_col, bias_col, temb_col, tn_col],
                           axis=1)                                       # (BC, BC+5)

    loss = pl.pallas_call(
        _diffusion_loss_kernel,
        out_shape=jax.ShapeDtypeStruct((1, 1), jnp.float32),
        in_specs=[pl.BlockSpec(memory_space=pltpu.MemorySpace.VMEM)
                  for _ in range(3)],
        out_specs=pl.BlockSpec(memory_space=pltpu.MemorySpace.SMEM),
    )(x2, n2, coef)
    return loss[0, 0]


def _reference_loss(x, noise, t, sqrt_ac, sqrt_1mac, w, bias, temb):
    x3 = x.reshape(B, C, M)
    n3 = noise.reshape(B, C, M)
    ca = sqrt_ac[t][:, None, None]
    cb = sqrt_1mac[t][:, None, None]
    perturbed = ca * x3 + cb * n3
    t_norm = (t.astype(jnp.float32) / NUM_TIMESTEPS)[:, None, None]
    est = jnp.einsum("ij,bjm->bim", w, perturbed) + bias[None] + temb[None] * t_norm
    return jnp.mean((est - n3) ** 2)


if __name__ == "__main__":
    # Diffusion schedule buffers (as in __init__), deterministic.
    betas = np.linspace(1e-4, 2e-2, NUM_TIMESTEPS, dtype=np.float64)
    alphas = 1.0 - betas
    alphas_cumprod = np.cumprod(alphas)
    sqrt_ac = jnp.asarray(np.sqrt(alphas_cumprod), dtype=jnp.float32)
    sqrt_1mac = jnp.asarray(np.sqrt(1.0 - alphas_cumprod), dtype=jnp.float32)

    # Deterministic inputs / parameters (the module samples t and noise internally;
    # here they are sampled deterministically on the host for reproducibility).
    key = jax.random.PRNGKey(0)
    kx, kn, kt, kw, kb, ke = jax.random.split(key, 6)
    x = jax.random.normal(kx, (B, C, T_FRAMES, H, W_SP), dtype=jnp.float32)
    noise = jax.random.normal(kn, (B, C, T_FRAMES, H, W_SP), dtype=jnp.float32)
    t = jax.random.randint(kt, (B,), 0, NUM_TIMESTEPS, dtype=jnp.int32)

    # Synthetic denoiser parameters (stand-in for the external `model` arg).
    w = (0.8 * jnp.eye(C, dtype=jnp.float32)
         + 0.05 * jax.random.normal(kw, (C, C), dtype=jnp.float32))
    bias = 0.01 * jax.random.normal(kb, (C, 1), dtype=jnp.float32)
    temb = 0.02 * jax.random.normal(ke, (C, 1), dtype=jnp.float32)

    loss = gaussian_diffusion_loss(x, noise, t, sqrt_ac, sqrt_1mac, w, bias, temb)
    loss = jax.block_until_ready(loss)

    ref = jax.block_until_ready(
        _reference_loss(x, noise, t, sqrt_ac, sqrt_1mac, w, bias, temb))
    np.testing.assert_allclose(np.asarray(loss), np.asarray(ref), rtol=1e-4, atol=1e-5)

    # TODO(synk): EMA bookkeeping and the sampling loops (remove_noise / DDIM
    # implicit_sample) are inference-time host loops around the external model,
    # not part of forward(); they are not implemented as kernels here.
    print("KERNEL_OK")
</pallas_src>

<mosaic_0001>
module attributes {stable_mosaic.version = 11 : i64} {
  func.func @_diffusion_loss_kernel(%arg0: memref<8x2048xf32, #tpu.memory_space<vmem>>, %arg1: memref<8x2048xf32, #tpu.memory_space<vmem>>, %arg2: memref<8x13xf32, #tpu.memory_space<vmem>>, %arg3: memref<1x1xf32, #tpu.memory_space<smem>>) attributes {dimension_semantics = [], scalar_prefetch = 0 : i64, scratch_operands = 0 : i64, tpu.core_type = #tpu.core_type<tc>} {
    %c0 = arith.constant 0 : index
    %c0_0 = arith.constant 0 : index
    %0 = vector.load %arg0[%c0, %c0_0] : memref<8x2048xf32, #tpu.memory_space<vmem>>, vector<8x2048xf32>
    %c0_1 = arith.constant 0 : index
    %c0_2 = arith.constant 0 : index
    %1 = vector.load %arg1[%c0_1, %c0_2] : memref<8x2048xf32, #tpu.memory_space<vmem>>, vector<8x2048xf32>
    %c0_3 = arith.constant 0 : index
    %c0_4 = arith.constant 0 : index
    %2 = vector.load %arg2[%c0_3, %c0_4] : memref<8x13xf32, #tpu.memory_space<vmem>>, vector<8x13xf32>
    %3 = vector.extract_strided_slice %2 {offsets = [0, 0], sizes = [8, 8], strides = [1, 1]} : vector<8x13xf32> to vector<8x8xf32>
    %4 = vector.extract_strided_slice %2 {offsets = [0, 8], sizes = [8, 1], strides = [1, 1]} : vector<8x13xf32> to vector<8x1xf32>
    %5 = vector.extract_strided_slice %2 {offsets = [0, 9], sizes = [8, 1], strides = [1, 1]} : vector<8x13xf32> to vector<8x1xf32>
    %6 = vector.extract_strided_slice %2 {offsets = [0, 10], sizes = [8, 1], strides = [1, 1]} : vector<8x13xf32> to vector<8x1xf32>
    %7 = vector.extract_strided_slice %2 {offsets = [0, 11], sizes = [8, 1], strides = [1, 1]} : vector<8x13xf32> to vector<8x1xf32>
    %8 = vector.extract_strided_slice %2 {offsets = [0, 12], sizes = [8, 1], strides = [1, 1]} : vector<8x13xf32> to vector<8x1xf32>
    %9 = vector.broadcast %4 : vector<8x1xf32> to vector<8x2048xf32>
    %10 = arith.mulf %9, %0 : vector<8x2048xf32>
    %11 = vector.broadcast %5 : vector<8x1xf32> to vector<8x2048xf32>
    %12 = arith.mulf %11, %1 : vector<8x2048xf32>
    %13 = arith.addf %10, %12 : vector<8x2048xf32>
    %14 = vector.extract_strided_slice %3 {offsets = [0, 0], sizes = [8, 1], strides = [1, 1]} : vector<8x8xf32> to vector<8x1xf32>
    %15 = vector.extract_strided_slice %13 {offsets = [0, 0], sizes = [1, 2048], strides = [1, 1]} : vector<8x2048xf32> to vector<1x2048xf32>
    %16 = vector.broadcast %14 : vector<8x1xf32> to vector<8x2048xf32>
    %17 = vector.broadcast %15 : vector<1x2048xf32> to vector<8x2048xf32>
    %18 = arith.mulf %16, %17 : vector<8x2048xf32>
    %19 = vector.extract_strided_slice %3 {offsets = [0, 1], sizes = [8, 1], strides = [1, 1]} : vector<8x8xf32> to vector<8x1xf32>
    %20 = vector.extract_strided_slice %13 {offsets = [1, 0], sizes = [1, 2048], strides = [1, 1]} : vector<8x2048xf32> to vector<1x2048xf32>
    %21 = vector.broadcast %19 : vector<8x1xf32> to vector<8x2048xf32>
    %22 = vector.broadcast %20 : vector<1x2048xf32> to vector<8x2048xf32>
    %23 = arith.mulf %21, %22 : vector<8x2048xf32>
    %24 = arith.addf %18, %23 : vector<8x2048xf32>
    %25 = vector.extract_strided_slice %3 {offsets = [0, 2], sizes = [8, 1], strides = [1, 1]} : vector<8x8xf32> to vector<8x1xf32>
    %26 = vector.extract_strided_slice %13 {offsets = [2, 0], sizes = [1, 2048], strides = [1, 1]} : vector<8x2048xf32> to vector<1x2048xf32>
    %27 = vector.broadcast %25 : vector<8x1xf32> to vector<8x2048xf32>
    %28 = vector.broadcast %26 : vector<1x2048xf32> to vector<8x2048xf32>
    %29 = arith.mulf %27, %28 : vector<8x2048xf32>
    %30 = arith.addf %24, %29 : vector<8x2048xf32>
    %31 = vector.extract_strided_slice %3 {offsets = [0, 3], sizes = [8, 1], strides = [1, 1]} : vector<8x8xf32> to vector<8x1xf32>
    %32 = vector.extract_strided_slice %13 {offsets = [3, 0], sizes = [1, 2048], strides = [1, 1]} : vector<8x2048xf32> to vector<1x2048xf32>
    %33 = vector.broadcast %31 : vector<8x1xf32> to vector<8x2048xf32>
    %34 = vector.broadcast %32 : vector<1x2048xf32> to vector<8x2048xf32>
    %35 = arith.mulf %33, %34 : vector<8x2048xf32>
    %36 = arith.addf %30, %35 : vector<8x2048xf32>
    %37 = vector.extract_strided_slice %3 {offsets = [0, 4], sizes = [8, 1], strides = [1, 1]} : vector<8x8xf32> to vector<8x1xf32>
    %38 = vector.extract_strided_slice %13 {offsets = [4, 0], sizes = [1, 2048], strides = [1, 1]} : vector<8x2048xf32> to vector<1x2048xf32>
    %39 = vector.broadcast %37 : vector<8x1xf32> to vector<8x2048xf32>
    %40 = vector.broadcast %38 : vector<1x2048xf32> to vector<8x2048xf32>
    %41 = arith.mulf %39, %40 : vector<8x2048xf32>
    %42 = arith.addf %36, %41 : vector<8x2048xf32>
    %43 = vector.extract_strided_slice %3 {offsets = [0, 5], sizes = [8, 1], strides = [1, 1]} : vector<8x8xf32> to vector<8x1xf32>
    %44 = vector.extract_strided_slice %13 {offsets = [5, 0], sizes = [1, 2048], strides = [1, 1]} : vector<8x2048xf32> to vector<1x2048xf32>
    %45 = vector.broadcast %43 : vector<8x1xf32> to vector<8x2048xf32>
    %46 = vector.broadcast %44 : vector<1x2048xf32> to vector<8x2048xf32>
    %47 = arith.mulf %45, %46 : vector<8x2048xf32>
    %48 = arith.addf %42, %47 : vector<8x2048xf32>
    %49 = vector.extract_strided_slice %3 {offsets = [0, 6], sizes = [8, 1], strides = [1, 1]} : vector<8x8xf32> to vector<8x1xf32>
    %50 = vector.extract_strided_slice %13 {offsets = [6, 0], sizes = [1, 2048], strides = [1, 1]} : vector<8x2048xf32> to vector<1x2048xf32>
    %51 = vector.broadcast %49 : vector<8x1xf32> to vector<8x2048xf32>
    %52 = vector.broadcast %50 : vector<1x2048xf32> to vector<8x2048xf32>
    %53 = arith.mulf %51, %52 : vector<8x2048xf32>
    %54 = arith.addf %48, %53 : vector<8x2048xf32>
    %55 = vector.extract_strided_slice %3 {offsets = [0, 7], sizes = [8, 1], strides = [1, 1]} : vector<8x8xf32> to vector<8x1xf32>
    %56 = vector.extract_strided_slice %13 {offsets = [7, 0], sizes = [1, 2048], strides = [1, 1]} : vector<8x2048xf32> to vector<1x2048xf32>
    %57 = vector.broadcast %55 : vector<8x1xf32> to vector<8x2048xf32>
    %58 = vector.broadcast %56 : vector<1x2048xf32> to vector<8x2048xf32>
    %59 = arith.mulf %57, %58 : vector<8x2048xf32>
    %60 = arith.addf %54, %59 : vector<8x2048xf32>
    %61 = vector.broadcast %6 : vector<8x1xf32> to vector<8x2048xf32>
    %62 = arith.addf %60, %61 : vector<8x2048xf32>
    %63 = arith.mulf %7, %8 : vector<8x1xf32>
    %64 = vector.broadcast %63 : vector<8x1xf32> to vector<8x2048xf32>
    %65 = arith.addf %62, %64 : vector<8x2048xf32>
    %66 = arith.subf %65, %1 : vector<8x2048xf32>
    %67 = arith.mulf %66, %66 : vector<8x2048xf32>
    %68 = vector.shape_cast %67 : vector<8x2048xf32> to vector<1x8x2048xf32>
    %cst = arith.constant dense<0.000000e+00> : vector<1xf32>
    %69 = vector.multi_reduction <add>, %68, %cst [1, 2] : vector<1x8x2048xf32> to vector<1xf32>
    %70 = vector.shape_cast %69 : vector<1xf32> to vector<1x1x1xf32>
    %71 = vector.extract %70[0, 0, 0] : f32 from vector<1x1x1xf32>
    %cst_5 = arith.constant 6.10351563E-5 : f32
    %72 = arith.mulf %71, %cst_5 : f32
    %c0_6 = arith.constant 0 : index
    %c0_7 = arith.constant 0 : index
    %73 = memref.load %arg3[%c0_6, %c0_7] : memref<1x1xf32, #tpu.memory_space<smem>>
    memref.store %72, %arg3[%c0_6, %c0_7] : memref<1x1xf32, #tpu.memory_space<smem>>
    return
  }
}

</mosaic_0001>

<llo_original>
// kernel: tpu_custom_call.1
$region0: #{tpu_custom_call.1}
  #allocation0 [shape = 'u32[]', space=smem, size = 0x4, offset = 0x4, fixed_abs, tag = 'smem constant byte address 0x4 - core index']
  #allocation1 [shape = 'u32[144,128]{1,0:T(1,128)}', space=vmem, size = 0x12000, scoped, tag = 'internal scratch']
  %s0 = inlined_call_operand.hbm [shape: f32[8,2048], index: 0, kind: input, shape index: {}]
  %s1 = inlined_call_operand.hbm [shape: f32[8,2048], index: 1, kind: input, shape index: {}]
  %s2 = inlined_call_operand.hbm [shape: f32[8,13], index: 2, kind: input, shape index: {}]
  %s3 = inlined_call_operand.hbm [shape: f32[1,1], index: 3, kind: output, shape index: {}]
  %s4 = sld [smem:[#allocation0]]
  $region34: #{tpu_custom_call.1} parent=0
    _
  %s6 = ssub.s32 1, %s4
  %s7 = scalar_select 0, %s6, %s4
  $region1: #{tpu_custom_call.1} parent=0
    #allocation2 [shape = 'u8[65536]{0}', space=vmem, size = 0x10000, scoped, tag = 'input window, operand 0, single buffered']
    #allocation3 [shape = 's32[1]{0}', space=sflag, size = 0x4, scoped, tag = 'scoped memory for tpu_custom_call.1']
    #allocation4 [shape = 's32[1]{0}', space=sflag, size = 0x4, scoped, tag = 'scoped memory for tpu_custom_call.1']
    #allocation5 [shape = 'u8[65536]{0}', space=vmem, size = 0x10000, scoped, tag = 'input window, operand 1, single buffered']
    #allocation6 [shape = 's32[1]{0}', space=sflag, size = 0x4, scoped, tag = 'scoped memory for tpu_custom_call.1']
    #allocation7 [shape = 'u8[4096]{0}', space=vmem, size = 0x1000, scoped, tag = 'input window, operand 2, single buffered']
    #allocation8 [shape = 'u8[512]{0}', space=smem, size = 0x200, scoped, tag = 'output window, operand 0, single buffered']
    %8 = vsyncpa [#allocation3], 0
    %9 = vsyncpa [#allocation6], 0
    %10 = vsyncpa [#allocation4], 0
    // Predicated region
    $region2: #{tpu_custom_call.1} parent=1 // pred_check
      _
    $region3: #{tpu_custom_call.1} parent=1 // pred_check_branch
      %12 = sbr.rel (0) target = $region5
    $region4: #{tpu_custom_call.1} parent=1 // pred_region
      %s14 = ssub.s32 2048, 2048
      %15 = vsyncadd [#allocation3], %s14
      %s17 = sshll.u32 [#allocation2], 4
      %s18 = int_to_ptr.vmem [resolvable:$true] %s17
      %20 = dma.hbm_to_vmem [thread:$0]  %s0, 2048, %s18, [#allocation3]
    $region5: #{tpu_custom_call.1} parent=1 // pred_fallthru
      _
    // Predicated region
    $region6: #{tpu_custom_call.1} parent=1 // pred_check
      _
    $region7: #{tpu_custom_call.1} parent=1 // pred_check_branch
      %22 = sbr.rel (0) target = $region9
    $region8: #{tpu_custom_call.1} parent=1 // pred_region
      %s24 = ssub.s32 2048, 2048
      %25 = vsyncadd [#allocation6], %s24
      %s27 = sshll.u32 [#allocation5], 4
      %s28 = int_to_ptr.vmem [resolvable:$true] %s27
      %30 = dma.hbm_to_vmem [thread:$0]  %s1, 2048, %s28, [#allocation6]
    $region9: #{tpu_custom_call.1} parent=1 // pred_fallthru
      _
    // Predicated region
    $region10: #{tpu_custom_call.1} parent=1 // pred_check
      _
    $region11: #{tpu_custom_call.1} parent=1 // pred_check_branch
      %32 = sbr.rel (0) target = $region13
    $region12: #{tpu_custom_call.1} parent=1 // pred_region
      %s34 = ssub.s32 128, 128
      %35 = vsyncadd [#allocation6], %s34
      %s37 = sshll.u32 [#allocation7], 4
      %s38 = int_to_ptr.vmem [resolvable:$true] %s37
      %40 = dma.hbm_to_vmem [thread:$0]  %s2, 128, %s38, [#allocation6]
    $region13: #{tpu_custom_call.1} parent=1 // pred_fallthru
      _
    // Predicated region
    $region14: #{tpu_custom_call.1} parent=1 // pred_check
      _
    $region15: #{tpu_custom_call.1} parent=1 // pred_check_branch
      %42 = sbr.rel (0) target = $region17
    $region16: #{tpu_custom_call.1} parent=1 // pred_region
      %43 = dma.done [#allocation3], 2048
    $region17: #{tpu_custom_call.1} parent=1 // pred_fallthru
      _
    // Predicated region
    $region18: #{tpu_custom_call.1} parent=1 // pred_check
      _
    $region19: #{tpu_custom_call.1} parent=1 // pred_check_branch
      %45 = sbr.rel (0) target = $region21
    $region20: #{tpu_custom_call.1} parent=1 // pred_region
      %46 = dma.done [#allocation6], 2048
    $region21: #{tpu_custom_call.1} parent=1 // pred_fallthru
      _
    // Predicated region
    $region22: #{tpu_custom_call.1} parent=1 // pred_check
      _
    $region23: #{tpu_custom_call.1} parent=1 // pred_check_branch
      %48 = sbr.rel (0) target = $region25
    $region24: #{tpu_custom_call.1} parent=1 // pred_region
      %49 = dma.done [#allocation6], 128
    $region25: #{tpu_custom_call.1} parent=1 // pred_fallthru
      _
    %v50 = vld [vmem:[#allocation2] sm:$0xff]
    %v51 = vld [vmem:[#allocation2 + $0x8] sm:$0xff]
    %v52 = vld [vmem:[#allocation2 + $0x10] sm:$0xff]
    %v53 = vld [vmem:[#allocation2 + $0x18] sm:$0xff]
    %v54 = vld [vmem:[#allocation2 + $0x20] sm:$0xff]
    %v55 = vld [vmem:[#allocation2 + $0x28] sm:$0xff]
    %v56 = vld [vmem:[#allocation2 + $0x30] sm:$0xff]
    %v57 = vld [vmem:[#allocation2 + $0x38] sm:$0xff]
    %v58 = vld [vmem:[#allocation2 + $0x40] sm:$0xff]
    %v59 = vld [vmem:[#allocation2 + $0x48] sm:$0xff]
    %v60 = vld [vmem:[#allocation2 + $0x50] sm:$0xff]
    %v61 = vld [vmem:[#allocation2 + $0x58] sm:$0xff]
    %v62 = vld [vmem:[#allocation2 + $0x60] sm:$0xff]
    %v63 = vld [vmem:[#allocation2 + $0x68] sm:$0xff]
    %v64 = vld [vmem:[#allocation2 + $0x70] sm:$0xff]
    %v65 = vld [vmem:[#allocation2 + $0x78] sm:$0xff]
    %v66 = vld [vmem:[#allocation5] sm:$0xff]
    %v67 = vld [vmem:[#allocation5 + $0x8] sm:$0xff]
    %v68 = vld [vmem:[#allocation5 + $0x10] sm:$0xff]
    %v69 = vld [vmem:[#allocation5 + $0x18] sm:$0xff]
    %v70 = vld [vmem:[#allocation5 + $0x20] sm:$0xff]
    %v71 = vld [vmem:[#allocation5 + $0x28] sm:$0xff]
    %v72 = vld [vmem:[#allocation5 + $0x30] sm:$0xff]
    %v73 = vld [vmem:[#allocation5 + $0x38] sm:$0xff]
    %v74 = vld [vmem:[#allocation5 + $0x40] sm:$0xff]
    %v75 = vld [vmem:[#allocation5 + $0x48] sm:$0xff]
    %v76 = vld [vmem:[#allocation5 + $0x50] sm:$0xff]
    %v77 = vld [vmem:[#allocation5 + $0x58] sm:$0xff]
    %v78 = vld [vmem:[#allocation5 + $0x60] sm:$0xff]
    %v79 = vld [vmem:[#allocation5 + $0x68] sm:$0xff]
    %v80 = vld [vmem:[#allocation5 + $0x70] sm:$0xff]
    %v81 = vld [vmem:[#allocation5 + $0x78] sm:$0xff]
    %v82 = vld [vmem:[#allocation7] sm:$0xff]
    %84 = vset.pattern.permute.xlu0 8
    %85 = vperm.xlu0 %84, %v82
    %v86 = vpop.permute.xlu0 %85
    %v88 = vmul.f32 %v86, %v50
    %v89 = vmul.f32 %v86, %v51
    %v90 = vmul.f32 %v86, %v52
    %v91 = vmul.f32 %v86, %v53
    %v92 = vmul.f32 %v86, %v54
    %v93 = vmul.f32 %v86, %v55
    %v94 = vmul.f32 %v86, %v56
    %v95 = vmul.f32 %v86, %v57
    %v96 = vmul.f32 %v86, %v58
    %v97 = vmul.f32 %v86, %v59
    %v98 = vmul.f32 %v86, %v60
    %v99 = vmul.f32 %v86, %v61
    %v100 = vmul.f32 %v86, %v62
    %v101 = vmul.f32 %v86, %v63
    %v102 = vmul.f32 %v86, %v64
    %v103 = vmul.f32 %v86, %v65
    %104 = vset.pattern.permute.xlu0 9
    %105 = vperm.xlu0 %104, %v82
    %v106 = vpop.permute.xlu0 %105
    %v108 = vmul.f32 %v106, %v66
    %v109 = vmul.f32 %v106, %v67
    %v110 = vmul.f32 %v106, %v68
    %v111 = vmul.f32 %v106, %v69
    %v112 = vmul.f32 %v106, %v70
    %v113 = vmul.f32 %v106, %v71
    %v114 = vmul.f32 %v106, %v72
    %v115 = vmul.f32 %v106, %v73
    %v116 = vmul.f32 %v106, %v74
    %v117 = vmul.f32 %v106, %v75
    %v118 = vmul.f32 %v106, %v76
    %v119 = vmul.f32 %v106, %v77
    %v120 = vmul.f32 %v106, %v78
    %v121 = vmul.f32 %v106, %v79
    %v122 = vmul.f32 %v106, %v80
    %v123 = vmul.f32 %v106, %v81
    %v124 = vadd.f32 %v88, %v108
    %v125 = vadd.f32 %v89, %v109
    %v126 = vadd.f32 %v90, %v110
    %v127 = vadd.f32 %v91, %v111
    %v128 = vadd.f32 %v92, %v112
    %v129 = vadd.f32 %v93, %v113
    %v130 = vadd.f32 %v94, %v114
    %v131 = vadd.f32 %v95, %v115
    %v132 = vadd.f32 %v96, %v116
    %v133 = vadd.f32 %v97, %v117
    %v134 = vadd.f32 %v98, %v118
    %v135 = vadd.f32 %v99, %v119
    %v136 = vadd.f32 %v100, %v120
    %v137 = vadd.f32 %v101, %v121
    %v138 = vadd.f32 %v102, %v122
    %v139 = vadd.f32 %v103, %v123
    %140 = vset.pattern.permute.xlu0 0
    %141 = vperm.xlu0 %140, %v82
    %v142 = vpop.permute.xlu0 %141
    %v144 = vlaneseq
    %v145 = vshrl.u32 %v144, 7
    %v146 = vsub.s32 0, %v145
    %v147 = vrot.slane %v124, %v146
    %v148 = vlaneseq
    %v149 = vshrl.u32 %v148, 7
    %v150 = vsub.s32 0, %v149
    %v151 = vrot.slane %v125, %v150
    %v152 = vlaneseq
    %v153 = vshrl.u32 %v152, 7
    %v154 = vsub.s32 0, %v153
    %v155 = vrot.slane %v126, %v154
    %v156 = vlaneseq
    %v157 = vshrl.u32 %v156, 7
    %v158 = vsub.s32 0, %v157
    %v159 = vrot.slane %v127, %v158
    %v160 = vlaneseq
    %v161 = vshrl.u32 %v160, 7
    %v162 = vsub.s32 0, %v161
    %v163 = vrot.slane %v128, %v162
    %v164 = vlaneseq
    %v165 = vshrl.u32 %v164, 7
    %v166 = vsub.s32 0, %v165
    %v167 = vrot.slane %v129, %v166
    %v168 = vlaneseq
    %v169 = vshrl.u32 %v168, 7
    %v170 = vsub.s32 0, %v169
    %v171 = vrot.slane %v130, %v170
    %v172 = vlaneseq
    %v173 = vshrl.u32 %v172, 7
    %v174 = vsub.s32 0, %v173
    %v175 = vrot.slane %v131, %v174
    %v176 = vlaneseq
    %v177 = vshrl.u32 %v176, 7
    %v178 = vsub.s32 0, %v177
    %v179 = vrot.slane %v132, %v178
    %v180 = vlaneseq
    %v181 = vshrl.u32 %v180, 7
    %v182 = vsub.s32 0, %v181
    %v183 = vrot.slane %v133, %v182
    %v184 = vlaneseq
    %v185 = vshrl.u32 %v184, 7
    %v186 = vsub.s32 0, %v185
    %v187 = vrot.slane %v134, %v186
    %v188 = vlaneseq
    %v189 = vshrl.u32 %v188, 7
    %v190 = vsub.s32 0, %v189
    %v191 = vrot.slane %v135, %v190
    %v192 = vlaneseq
    %v193 = vshrl.u32 %v192, 7
    %v194 = vsub.s32 0, %v193
    %v195 = vrot.slane %v136, %v194
    %v196 = vlaneseq
    %v197 = vshrl.u32 %v196, 7
    %v198 = vsub.s32 0, %v197
    %v199 = vrot.slane %v137, %v198
    %v200 = vlaneseq
    %v201 = vshrl.u32 %v200, 7
    %v202 = vsub.s32 0, %v201
    %v203 = vrot.slane %v138, %v202
    %v204 = vlaneseq
    %v205 = vshrl.u32 %v204, 7
    %v206 = vsub.s32 0, %v205
    %v207 = vrot.slane %v139, %v206
    %v208 = vmul.f32 %v142, %v147
    %v209 = vmul.f32 %v142, %v151
    %v210 = vmul.f32 %v142, %v155
    %v211 = vmul.f32 %v142, %v159
    %v212 = vmul.f32 %v142, %v163
    %v213 = vmul.f32 %v142, %v167
    %v214 = vmul.f32 %v142, %v171
    %v215 = vmul.f32 %v142, %v175
    %v216 = vmul.f32 %v142, %v179
    %v217 = vmul.f32 %v142, %v183
    %v218 = vmul.f32 %v142, %v187
    %v219 = vmul.f32 %v142, %v191
    %v220 = vmul.f32 %v142, %v195
    %v221 = vmul.f32 %v142, %v199
    %v222 = vmul.f32 %v142, %v203
    %v223 = vmul.f32 %v142, %v207
    %224 = vset.pattern.permute.xlu0 1
    %225 = vperm.xlu0 %224, %v82
    %v226 = vpop.permute.xlu0 %225
    %v228 = vlaneseq
    %v229 = vshrl.u32 %v228, 7
    %v230 = vsub.s32 1, %v229
    %v231 = vrot.slane %v124, %v230
    %v232 = vlaneseq
    %v233 = vshrl.u32 %v232, 7
    %v234 = vsub.s32 1, %v233
    %v235 = vrot.slane %v125, %v234
    %v236 = vlaneseq
    %v237 = vshrl.u32 %v236, 7
    %v238 = vsub.s32 1, %v237
    %v239 = vrot.slane %v126, %v238
    %v240 = vlaneseq
    %v241 = vshrl.u32 %v240, 7
    %v242 = vsub.s32 1, %v241
    %v243 = vrot.slane %v127, %v242
    %v244 = vlaneseq
    %v245 = vshrl.u32 %v244, 7
    %v246 = vsub.s32 1, %v245
    %v247 = vrot.slane %v128, %v246
    %v248 = vlaneseq
    %v249 = vshrl.u32 %v248, 7
    %v250 = vsub.s32 1, %v249
    %v251 = vrot.slane %v129, %v250
    %v252 = vlaneseq
    %v253 = vshrl.u32 %v252, 7
    %v254 = vsub.s32 1, %v253
    %v255 = vrot.slane %v130, %v254
    %v256 = vlaneseq
    %v257 = vshrl.u32 %v256, 7
    %v258 = vsub.s32 1, %v257
    %v259 = vrot.slane %v131, %v258
    %v260 = vlaneseq
    %v261 = vshrl.u32 %v260, 7
    %v262 = vsub.s32 1, %v261
    %v263 = vrot.slane %v132, %v262
    %v264 = vlaneseq
    %v265 = vshrl.u32 %v264, 7
    %v266 = vsub.s32 1, %v265
    %v267 = vrot.slane %v133, %v266
    %v268 = vlaneseq
    %v269 = vshrl.u32 %v268, 7
    %v270 = vsub.s32 1, %v269
    %v271 = vrot.slane %v134, %v270
    %v272 = vlaneseq
    %v273 = vshrl.u32 %v272, 7
    %v274 = vsub.s32 1, %v273
    %v275 = vrot.slane %v135, %v274
    %v276 = vlaneseq
    %v277 = vshrl.u32 %v276, 7
    %v278 = vsub.s32 1, %v277
    %v279 = vrot.slane %v136, %v278
    %v280 = vlaneseq
    %v281 = vshrl.u32 %v280, 7
    %v282 = vsub.s32 1, %v281
    %v283 = vrot.slane %v137, %v282
    %v284 = vlaneseq
    %v285 = vshrl.u32 %v284, 7
    %v286 = vsub.s32 1, %v285
    %v287 = vrot.slane %v138, %v286
    %v288 = vlaneseq
    %v289 = vshrl.u32 %v288, 7
    %v290 = vsub.s32 1, %v289
    %v291 = vrot.slane %v139, %v290
    %v292 = vmul.f32 %v226, %v231
    %v293 = vmul.f32 %v226, %v235
    %v294 = vmul.f32 %v226, %v239
    %v295 = vmul.f32 %v226, %v243
    %v296 = vmul.f32 %v226, %v247
    %v297 = vmul.f32 %v226, %v251
    %v298 = vmul.f32 %v226, %v255
    %v299 = vmul.f32 %v226, %v259
    %v300 = vmul.f32 %v226, %v263
    %v301 = vmul.f32 %v226, %v267
    %v302 = vmul.f32 %v226, %v271
    %v303 = vmul.f32 %v226, %v275
    %v304 = vmul.f32 %v226, %v279
    %v305 = vmul.f32 %v226, %v283
    %v306 = vmul.f32 %v226, %v287
    %v307 = vmul.f32 %v226, %v291
    %v308 = vadd.f32 %v208, %v292
    %v309 = vadd.f32 %v209, %v293
    %v310 = vadd.f32 %v210, %v294
    %v311 = vadd.f32 %v211, %v295
    %v312 = vadd.f32 %v212, %v296
    %v313 = vadd.f32 %v213, %v297
    %v314 = vadd.f32 %v214, %v298
    %v315 = vadd.f32 %v215, %v299
    %v316 = vadd.f32 %v216, %v300
    %v317 = vadd.f32 %v217, %v301
    %v318 = vadd.f32 %v218, %v302
    %v319 = vadd.f32 %v219, %v303
    %v320 = vadd.f32 %v220, %v304
    %v321 = vadd.f32 %v221, %v305
    %v322 = vadd.f32 %v222, %v306
    %v323 = vadd.f32 %v223, %v307
    %324 = vset.pattern.permute.xlu0 2
    %325 = vperm.xlu0 %324, %v82
    %v326 = vpop.permute.xlu0 %325
    %v328 = vlaneseq
    %v329 = vshrl.u32 %v328, 7
    %v330 = vsub.s32 2, %v329
    %v331 = vrot.slane %v124, %v330
    %v332 = vlaneseq
    %v333 = vshrl.u32 %v332, 7
    %v334 = vsub.s32 2, %v333
    %v335 = vrot.slane %v125, %v334
    %v336 = vlaneseq
    %v337 = vshrl.u32 %v336, 7
    %v338 = vsub.s32 2, %v337
    %v339 = vrot.slane %v126, %v338
    %v340 = vlaneseq
    %v341 = vshrl.u32 %v340, 7
    %v342 = vsub.s32 2, %v341
    %v343 = vrot.slane %v127, %v342
    %v344 = vlaneseq
    %v345 = vshrl.u32 %v344, 7
    %v346 = vsub.s32 2, %v345
    %v347 = vrot.slane %v128, %v346
    %v348 = vlaneseq
    %v349 = vshrl.u32 %v348, 7
    %v350 = vsub.s32 2, %v349
    %v351 = vrot.slane %v129, %v350
    %v352 = vlaneseq
    %v353 = vshrl.u32 %v352, 7
    %v354 = vsub.s32 2, %v353
    %v355 = vrot.slane %v130, %v354
    %v356 = vlaneseq
    %v357 = vshrl.u32 %v356, 7
    %v358 = vsub.s32 2, %v357
    %v359 = vrot.slane %v131, %v358
    %v360 = vlaneseq
    %v361 = vshrl.u32 %v360, 7
    %v362 = vsub.s32 2, %v361
    %v363 = vrot.slane %v132, %v362
    %v364 = vlaneseq
    %v365 = vshrl.u32 %v364, 7
    %v366 = vsub.s32 2, %v365
    %v367 = vrot.slane %v133, %v366
    %v368 = vlaneseq
    %v369 = vshrl.u32 %v368, 7
    %v370 = vsub.s32 2, %v369
    %v371 = vrot.slane %v134, %v370
    %v372 = vlaneseq
    %v373 = vshrl.u32 %v372, 7
    %v374 = vsub.s32 2, %v373
    %v375 = vrot.slane %v135, %v374
    %v376 = vlaneseq
    %v377 = vshrl.u32 %v376, 7
    %v378 = vsub.s32 2, %v377
    %v379 = vrot.slane %v136, %v378
    %v380 = vlaneseq
    %v381 = vshrl.u32 %v380, 7
    %v382 = vsub.s32 2, %v381
    %v383 = vrot.slane %v137, %v382
    %v384 = vlaneseq
    %v385 = vshrl.u32 %v384, 7
    %v386 = vsub.s32 2, %v385
    %v387 = vrot.slane %v138, %v386
    %v388 = vlaneseq
    %v389 = vshrl.u32 %v388, 7
    %v390 = vsub.s32 2, %v389
    %v391 = vrot.slane %v139, %v390
    %v392 = vmul.f32 %v326, %v331
    %v393 = vmul.f32 %v326, %v335
    %v394 = vmul.f32 %v326, %v339
    %v395 = vmul.f32 %v326, %v343
    %v396 = vmul.f32 %v326, %v347
    %v397 = vmul.f32 %v326, %v351
    %v398 = vmul.f32 %v326, %v355
    %v399 = vmul.f32 %v326, %v359
    %v400 = vmul.f32 %v326, %v363
    %v401 = vmul.f32 %v326, %v367
    %v402 = vmul.f32 %v326, %v371
    %v403 = vmul.f32 %v326, %v375
    %v404 = vmul.f32 %v326, %v379
    %v405 = vmul.f32 %v326, %v383
    %v406 = vmul.f32 %v326, %v387
    %v407 = vmul.f32 %v326, %v391
    %v408 = vadd.f32 %v308, %v392
    %v409 = vadd.f32 %v309, %v393
    %v410 = vadd.f32 %v310, %v394
    %v411 = vadd.f32 %v311, %v395
    %v412 = vadd.f32 %v312, %v396
    %v413 = vadd.f32 %v313, %v397
    %v414 = vadd.f32 %v314, %v398
    %v415 = vadd.f32 %v315, %v399
    %v416 = vadd.f32 %v316, %v400
    %v417 = vadd.f32 %v317, %v401
    %v418 = vadd.f32 %v318, %v402
    %v419 = vadd.f32 %v319, %v403
    %v420 = vadd.f32 %v320, %v404
    %v421 = vadd.f32 %v321, %v405
    %v422 = vadd.f32 %v322, %v406
    %v423 = vadd.f32 %v323, %v407
    %424 = vset.pattern.permute.xlu0 3
    %425 = vperm.xlu0 %424, %v82
    %v426 = vpop.permute.xlu0 %425
    %v428 = vlaneseq
    %v429 = vshrl.u32 %v428, 7
    %v430 = vsub.s32 3, %v429
    %v431 = vrot.slane %v124, %v430
    %v432 = vlaneseq
    %v433 = vshrl.u32 %v432, 7
    %v434 = vsub.s32 3, %v433
    %v435 = vrot.slane %v125, %v434
    %v436 = vlaneseq
    %v437 = vshrl.u32 %v436, 7
    %v438 = vsub.s32 3, %v437
    %v439 = vrot.slane %v126, %v438
    %v440 = vlaneseq
    %v441 = vshrl.u32 %v440, 7
    %v442 = vsub.s32 3, %v441
    %v443 = vrot.slane %v127, %v442
    %v444 = vlaneseq
    %v445 = vshrl.u32 %v444, 7
    %v446 = vsub.s32 3, %v445
    %v447 = vrot.slane %v128, %v446
    %v448 = vlaneseq
    %v449 = vshrl.u32 %v448, 7
    %v450 = vsub.s32 3, %v449
    %v451 = vrot.slane %v129, %v450
    %v452 = vlaneseq
    %v453 = vshrl.u32 %v452, 7
    %v454 = vsub.s32 3, %v453
    %v455 = vrot.slane %v130, %v454
    %v456 = vlaneseq
    %v457 = vshrl.u32 %v456, 7
    %v458 = vsub.s32 3, %v457
    %v459 = vrot.slane %v131, %v458
    %v460 = vlaneseq
    %v461 = vshrl.u32 %v460, 7
    %v462 = vsub.s32 3, %v461
    %v463 = vrot.slane %v132, %v462
    %v464 = vlaneseq
    %v465 = vshrl.u32 %v464, 7
    %v466 = vsub.s32 3, %v465
    %v467 = vrot.slane %v133, %v466
    %v468 = vlaneseq
    %v469 = vshrl.u32 %v468, 7
    %v470 = vsub.s32 3, %v469
    %v471 = vrot.slane %v134, %v470
    %v472 = vlaneseq
    %v473 = vshrl.u32 %v472, 7
    %v474 = vsub.s32 3, %v473
    %v475 = vrot.slane %v135, %v474
    %v476 = vlaneseq
    %v477 = vshrl.u32 %v476, 7
    %v478 = vsub.s32 3, %v477
    %v479 = vrot.slane %v136, %v478
    %v480 = vlaneseq
    %v481 = vshrl.u32 %v480, 7
    %v482 = vsub.s32 3, %v481
    %v483 = vrot.slane %v137, %v482
    %v484 = vlaneseq
    %v485 = vshrl.u32 %v484, 7
    %v486 = vsub.s32 3, %v485
    %v487 = vrot.slane %v138, %v486
    %v488 = vlaneseq
    %v489 = vshrl.u32 %v488, 7
    %v490 = vsub.s32 3, %v489
    %v491 = vrot.slane %v139, %v490
    %v492 = vmul.f32 %v426, %v431
    %v493 = vmul.f32 %v426, %v435
    %v494 = vmul.f32 %v426, %v439
    %v495 = vmul.f32 %v426, %v443
    %v496 = vmul.f32 %v426, %v447
    %v497 = vmul.f32 %v426, %v451
    %v498 = vmul.f32 %v426, %v455
    %v499 = vmul.f32 %v426, %v459
    %v500 = vmul.f32 %v426, %v463
    %v501 = vmul.f32 %v426, %v467
    %v502 = vmul.f32 %v426, %v471
    %v503 = vmul.f32 %v426, %v475
    %v504 = vmul.f32 %v426, %v479
    %v505 = vmul.f32 %v426, %v483
    %v506 = vmul.f32 %v426, %v487
    %v507 = vmul.f32 %v426, %v491
    %v508 = vadd.f32 %v408, %v492
    %v509 = vadd.f32 %v409, %v493
    %v510 = vadd.f32 %v410, %v494
    %v511 = vadd.f32 %v411, %v495
    %v512 = vadd.f32 %v412, %v496
    %v513 = vadd.f32 %v413, %v497
    %v514 = vadd.f32 %v414, %v498
    %v515 = vadd.f32 %v415, %v499
    %v516 = vadd.f32 %v416, %v500
    %v517 = vadd.f32 %v417, %v501
    %v518 = vadd.f32 %v418, %v502
    %v519 = vadd.f32 %v419, %v503
    %v520 = vadd.f32 %v420, %v504
    %v521 = vadd.f32 %v421, %v505
    %v522 = vadd.f32 %v422, %v506
    %v523 = vadd.f32 %v423, %v507
    %524 = vset.pattern.permute.xlu0 4
    %525 = vperm.xlu0 %524, %v82
    %v526 = vpop.permute.xlu0 %525
    %v528 = vlaneseq
    %v529 = vshrl.u32 %v528, 7
    %v530 = vsub.s32 4, %v529
    %v531 = vrot.slane %v124, %v530
    %v532 = vlaneseq
    %v533 = vshrl.u32 %v532, 7
    %v534 = vsub.s32 4, %v533
    %v535 = vrot.slane %v125, %v534
    %v536 = vlaneseq
    %v537 = vshrl.u32 %v536, 7
    %v538 = vsub.s32 4, %v537
    %v539 = vrot.slane %v126, %v538
    %v540 = vlaneseq
    %v541 = vshrl.u32 %v540, 7
    %v542 = vsub.s32 4, %v541
    %v543 = vrot.slane %v127, %v542
    %v544 = vlaneseq
    %v545 = vshrl.u32 %v544, 7
    %v546 = vsub.s32 4, %v545
    %v547 = vrot.slane %v128, %v546
    %v548 = vlaneseq
    %v549 = vshrl.u32 %v548, 7
    %v550 = vsub.s32 4, %v549
    %v551 = vrot.slane %v129, %v550
    %v552 = vlaneseq
    %v553 = vshrl.u32 %v552, 7
    %v554 = vsub.s32 4, %v553
    %v555 = vrot.slane %v130, %v554
    %v556 = vlaneseq
    %v557 = vshrl.u32 %v556, 7
    %v558 = vsub.s32 4, %v557
    %v559 = vrot.slane %v131, %v558
    %v560 = vlaneseq
    %v561 = vshrl.u32 %v560, 7
    %v562 = vsub.s32 4, %v561
    %v563 = vrot.slane %v132, %v562
    %v564 = vlaneseq
    %v565 = vshrl.u32 %v564, 7
    %v566 = vsub.s32 4, %v565
    %v567 = vrot.slane %v133, %v566
    %v568 = vlaneseq
    %v569 = vshrl.u32 %v568, 7
    %v570 = vsub.s32 4, %v569
    %v571 = vrot.slane %v134, %v570
    %v572 = vlaneseq
    %v573 = vshrl.u32 %v572, 7
    %v574 = vsub.s32 4, %v573
    %v575 = vrot.slane %v135, %v574
    %v576 = vlaneseq
    %v577 = vshrl.u32 %v576, 7
    %v578 = vsub.s32 4, %v577
    %v579 = vrot.slane %v136, %v578
    %v580 = vlaneseq
    %v581 = vshrl.u32 %v580, 7
    %v582 = vsub.s32 4, %v581
    %v583 = vrot.slane %v137, %v582
    %v584 = vlaneseq
    %v585 = vshrl.u32 %v584, 7
    %v586 = vsub.s32 4, %v585
    %v587 = vrot.slane %v138, %v586
    %v588 = vlaneseq
    %v589 = vshrl.u32 %v588, 7
    %v590 = vsub.s32 4, %v589
    %v591 = vrot.slane %v139, %v590
    %v592 = vmul.f32 %v526, %v531
    %v593 = vmul.f32 %v526, %v535
    %v594 = vmul.f32 %v526, %v539
    %v595 = vmul.f32 %v526, %v543
    %v596 = vmul.f32 %v526, %v547
    %v597 = vmul.f32 %v526, %v551
    %v598 = vmul.f32 %v526, %v555
    %v599 = vmul.f32 %v526, %v559
    %v600 = vmul.f32 %v526, %v563
    %v601 = vmul.f32 %v526, %v567
    %v602 = vmul.f32 %v526, %v571
    %v603 = vmul.f32 %v526, %v575
    %v604 = vmul.f32 %v526, %v579
    %v605 = vmul.f32 %v526, %v583
    %v606 = vmul.f32 %v526, %v587
    %v607 = vmul.f32 %v526, %v591
    %v608 = vadd.f32 %v508, %v592
    %v609 = vadd.f32 %v509, %v593
    %v610 = vadd.f32 %v510, %v594
    %v611 = vadd.f32 %v511, %v595
    %v612 = vadd.f32 %v512, %v596
    %v613 = vadd.f32 %v513, %v597
    %v614 = vadd.f32 %v514, %v598
    %v615 = vadd.f32 %v515, %v599
    %v616 = vadd.f32 %v516, %v600
    %v617 = vadd.f32 %v517, %v601
    %v618 = vadd.f32 %v518, %v602
    %v619 = vadd.f32 %v519, %v603
    %v620 = vadd.f32 %v520, %v604
    %v621 = vadd.f32 %v521, %v605
    %v622 = vadd.f32 %v522, %v606
    %v623 = vadd.f32 %v523, %v607
    %624 = vset.pattern.permute.xlu0 5
    %625 = vperm.xlu0 %624, %v82
    %v626 = vpop.permute.xlu0 %625
    %v628 = vlaneseq
    %v629 = vshrl.u32 %v628, 7
    %v630 = vsub.s32 5, %v629
    %v631 = vrot.slane %v124, %v630
    %v632 = vlaneseq
    %v633 = vshrl.u32 %v632, 7
    %v634 = vsub.s32 5, %v633
    %v635 = vrot.slane %v125, %v634
    %v636 = vlaneseq
    %v637 = vshrl.u32 %v636, 7
    %v638 = vsub.s32 5, %v637
    %v639 = vrot.slane %v126, %v638
    %v640 = vlaneseq
    %v641 = vshrl.u32 %v640, 7
    %v642 = vsub.s32 5, %v641
    %v643 = vrot.slane %v127, %v642
    %v644 = vlaneseq
    %v645 = vshrl.u32 %v644, 7
    %v646 = vsub.s32 5, %v645
    %v647 = vrot.slane %v128, %v646
    %v648 = vlaneseq
    %v649 = vshrl.u32 %v648, 7
    %v650 = vsub.s32 5, %v649
    %v651 = vrot.slane %v129, %v650
    %v652 = vlaneseq
    %v653 = vshrl.u32 %v652, 7
    %v654 = vsub.s32 5, %v653
    %v655 = vrot.slane %v130, %v654
    %v656 = vlaneseq
    %v657 = vshrl.u32 %v656, 7
    %v658 = vsub.s32 5, %v657
    %v659 = vrot.slane %v131, %v658
    %v660 = vlaneseq
    %v661 = vshrl.u32 %v660, 7
    %v662 = vsub.s32 5, %v661
    %v663 = vrot.slane %v132, %v662
    %v664 = vlaneseq
    %v665 = vshrl.u32 %v664, 7
    %v666 = vsub.s32 5, %v665
    %v667 = vrot.slane %v133, %v666
    %v668 = vlaneseq
    %v669 = vshrl.u32 %v668, 7
    %v670 = vsub.s32 5, %v669
    %v671 = vrot.slane %v134, %v670
    %v672 = vlaneseq
    %v673 = vshrl.u32 %v672, 7
    %v674 = vsub.s32 5, %v673
    %v675 = vrot.slane %v135, %v674
    %v676 = vlaneseq
    %v677 = vshrl.u32 %v676, 7
    %v678 = vsub.s32 5, %v677
    %v679 = vrot.slane %v136, %v678
    %v680 = vlaneseq
    %v681 = vshrl.u32 %v680, 7
    %v682 = vsub.s32 5, %v681
    %v683 = vrot.slane %v137, %v682
    %v684 = vlaneseq
    %v685 = vshrl.u32 %v684, 7
    %v686 = vsub.s32 5, %v685
    %v687 = vrot.slane %v138, %v686
    %v688 = vlaneseq
    %v689 = vshrl.u32 %v688, 7
    %v690 = vsub.s32 5, %v689
    %v691 = vrot.slane %v139, %v690
    %v692 = vmul.f32 %v626, %v631
    %v693 = vmul.f32 %v626, %v635
    %v694 = vmul.f32 %v626, %v639
    %v695 = vmul.f32 %v626, %v643
    %v696 = vmul.f32 %v626, %v647
    %v697 = vmul.f32 %v626, %v651
    %v698 = vmul.f32 %v626, %v655
    %v699 = vmul.f32 %v626, %v659
    %v700 = vmul.f32 %v626, %v663
    %v701 = vmul.f32 %v626, %v667
    %v702 = vmul.f32 %v626, %v671
    %v703 = vmul.f32 %v626, %v675
    %v704 = vmul.f32 %v626, %v679
    %v705 = vmul.f32 %v626, %v683
    %v706 = vmul.f32 %v626, %v687
    %v707 = vmul.f32 %v626, %v691
    %v708 = vadd.f32 %v608, %v692
    %v709 = vadd.f32 %v609, %v693
    %v710 = vadd.f32 %v610, %v694
    %v711 = vadd.f32 %v611, %v695
    %v712 = vadd.f32 %v612, %v696
    %v713 = vadd.f32 %v613, %v697
    %v714 = vadd.f32 %v614, %v698
    %v715 = vadd.f32 %v615, %v699
    %v716 = vadd.f32 %v616, %v700
    %v717 = vadd.f32 %v617, %v701
    %v718 = vadd.f32 %v618, %v702
    %v719 = vadd.f32 %v619, %v703
    %v720 = vadd.f32 %v620, %v704
    %v721 = vadd.f32 %v621, %v705
    %v722 = vadd.f32 %v622, %v706
    %v723 = vadd.f32 %v623, %v707
    %724 = vset.pattern.permute.xlu0 6
    %725 = vperm.xlu0 %724, %v82
    %v726 = vpop.permute.xlu0 %725
    %v728 = vlaneseq
    %v729 = vshrl.u32 %v728, 7
    %v730 = vsub.s32 6, %v729
    %v731 = vrot.slane %v124, %v730
    %v732 = vlaneseq
    %v733 = vshrl.u32 %v732, 7
    %v734 = vsub.s32 6, %v733
    %v735 = vrot.slane %v125, %v734
    %v736 = vlaneseq
    %v737 = vshrl.u32 %v736, 7
    %v738 = vsub.s32 6, %v737
    %v739 = vrot.slane %v126, %v738
    %v740 = vlaneseq
    %v741 = vshrl.u32 %v740, 7
    %v742 = vsub.s32 6, %v741
    %v743 = vrot.slane %v127, %v742
    %v744 = vlaneseq
    %v745 = vshrl.u32 %v744, 7
    %v746 = vsub.s32 6, %v745
    %v747 = vrot.slane %v128, %v746
    %v748 = vlaneseq
    %v749 = vshrl.u32 %v748, 7
    %v750 = vsub.s32 6, %v749
    %v751 = vrot.slane %v129, %v750
    %v752 = vlaneseq
    %v753 = vshrl.u32 %v752, 7
    %v754 = vsub.s32 6, %v753
    %v755 = vrot.slane %v130, %v754
    %v756 = vlaneseq
    %v757 = vshrl.u32 %v756, 7
    %v758 = vsub.s32 6, %v757
    %v759 = vrot.slane %v131, %v758
    %v760 = vlaneseq
    %v761 = vshrl.u32 %v760, 7
    %v762 = vsub.s32 6, %v761
    %v763 = vrot.slane %v132, %v762
    %v764 = vlaneseq
    %v765 = vshrl.u32 %v764, 7
    %v766 = vsub.s32 6, %v765
    %v767 = vrot.slane %v133, %v766
    %v768 = vlaneseq
    %v769 = vshrl.u32 %v768, 7
    %v770 = vsub.s32 6, %v769
    %v771 = vrot.slane %v134, %v770
    %v772 = vlaneseq
    %v773 = vshrl.u32 %v772, 7
    %v774 = vsub.s32 6, %v773
    %v775 = vrot.slane %v135, %v774
    %v776 = vlaneseq
    %v777 = vshrl.u32 %v776, 7
    %v778 = vsub.s32 6, %v777
    %v779 = vrot.slane %v136, %v778
    %v780 = vlaneseq
    %v781 = vshrl.u32 %v780, 7
    %v782 = vsub.s32 6, %v781
    %v783 = vrot.slane %v137, %v782
    %v784 = vlaneseq
    %v785 = vshrl.u32 %v784, 7
    %v786 = vsub.s32 6, %v785
    %v787 = vrot.slane %v138, %v786
    %v788 = vlaneseq
    %v789 = vshrl.u32 %v788, 7
    %v790 = vsub.s32 6, %v789
    %v791 = vrot.slane %v139, %v790
    %v792 = vmul.f32 %v726, %v731
    %v793 = vmul.f32 %v726, %v735
    %v794 = vmul.f32 %v726, %v739
    %v795 = vmul.f32 %v726, %v743
    %v796 = vmul.f32 %v726, %v747
    %v797 = vmul.f32 %v726, %v751
    %v798 = vmul.f32 %v726, %v755
    %v799 = vmul.f32 %v726, %v759
    %v800 = vmul.f32 %v726, %v763
    %v801 = vmul.f32 %v726, %v767
    %v802 = vmul.f32 %v726, %v771
    %v803 = vmul.f32 %v726, %v775
    %v804 = vmul.f32 %v726, %v779
    %v805 = vmul.f32 %v726, %v783
    %v806 = vmul.f32 %v726, %v787
    %v807 = vmul.f32 %v726, %v791
    %v808 = vadd.f32 %v708, %v792
    %v809 = vadd.f32 %v709, %v793
    %v810 = vadd.f32 %v710, %v794
    %v811 = vadd.f32 %v711, %v795
    %v812 = vadd.f32 %v712, %v796
    %v813 = vadd.f32 %v713, %v797
    %v814 = vadd.f32 %v714, %v798
    %v815 = vadd.f32 %v715, %v799
    %v816 = vadd.f32 %v716, %v800
    %v817 = vadd.f32 %v717, %v801
    %v818 = vadd.f32 %v718, %v802
    %v819 = vadd.f32 %v719, %v803
    %v820 = vadd.f32 %v720, %v804
    %v821 = vadd.f32 %v721, %v805
    %v822 = vadd.f32 %v722, %v806
    %v823 = vadd.f32 %v723, %v807
    %824 = vset.pattern.permute.xlu0 7
    %825 = vperm.xlu0 %824, %v82
    %v826 = vpop.permute.xlu0 %825
    %v828 = vlaneseq
    %v829 = vshrl.u32 %v828, 7
    %v830 = vsub.s32 7, %v829
    %v831 = vrot.slane %v124, %v830
    %v832 = vlaneseq
    %v833 = vshrl.u32 %v832, 7
    %v834 = vsub.s32 7, %v833
    %v835 = vrot.slane %v125, %v834
    %v836 = vlaneseq
    %v837 = vshrl.u32 %v836, 7
    %v838 = vsub.s32 7, %v837
    %v839 = vrot.slane %v126, %v838
    %v840 = vlaneseq
    %v841 = vshrl.u32 %v840, 7
    %v842 = vsub.s32 7, %v841
    %v843 = vrot.slane %v127, %v842
    %v844 = vlaneseq
    %v845 = vshrl.u32 %v844, 7
    %v846 = vsub.s32 7, %v845
    %v847 = vrot.slane %v128, %v846
    %v848 = vlaneseq
    %v849 = vshrl.u32 %v848, 7
    %v850 = vsub.s32 7, %v849
    %v851 = vrot.slane %v129, %v850
    %v852 = vlaneseq
    %v853 = vshrl.u32 %v852, 7
    %v854 = vsub.s32 7, %v853
    %v855 = vrot.slane %v130, %v854
    %v856 = vlaneseq
    %v857 = vshrl.u32 %v856, 7
    %v858 = vsub.s32 7, %v857
    %v859 = vrot.slane %v131, %v858
    %v860 = vlaneseq
    %v861 = vshrl.u32 %v860, 7
    %v862 = vsub.s32 7, %v861
    %v863 = vrot.slane %v132, %v862
    %v864 = vlaneseq
    %v865 = vshrl.u32 %v864, 7
    %v866 = vsub.s32 7, %v865
    %v867 = vrot.slane %v133, %v866
    %v868 = vlaneseq
    %v869 = vshrl.u32 %v868, 7
    %v870 = vsub.s32 7, %v869
    %v871 = vrot.slane %v134, %v870
    %v872 = vlaneseq
    %v873 = vshrl.u32 %v872, 7
    %v874 = vsub.s32 7, %v873
    %v875 = vrot.slane %v135, %v874
    %v876 = vlaneseq
    %v877 = vshrl.u32 %v876, 7
    %v878 = vsub.s32 7, %v877
    %v879 = vrot.slane %v136, %v878
    %v880 = vlaneseq
    %v881 = vshrl.u32 %v880, 7
    %v882 = vsub.s32 7, %v881
    %v883 = vrot.slane %v137, %v882
    %v884 = vlaneseq
    %v885 = vshrl.u32 %v884, 7
    %v886 = vsub.s32 7, %v885
    %v887 = vrot.slane %v138, %v886
    %v888 = vlaneseq
    %v889 = vshrl.u32 %v888, 7
    %v890 = vsub.s32 7, %v889
    %v891 = vrot.slane %v139, %v890
    %v892 = vmul.f32 %v826, %v831
    %v893 = vmul.f32 %v826, %v835
    %v894 = vmul.f32 %v826, %v839
    %v895 = vmul.f32 %v826, %v843
    %v896 = vmul.f32 %v826, %v847
    %v897 = vmul.f32 %v826, %v851
    %v898 = vmul.f32 %v826, %v855
    %v899 = vmul.f32 %v826, %v859
    %v900 = vmul.f32 %v826, %v863
    %v901 = vmul.f32 %v826, %v867
    %v902 = vmul.f32 %v826, %v871
    %v903 = vmul.f32 %v826, %v875
    %v904 = vmul.f32 %v826, %v879
    %v905 = vmul.f32 %v826, %v883
    %v906 = vmul.f32 %v826, %v887
    %v907 = vmul.f32 %v826, %v891
    %v908 = vadd.f32 %v808, %v892
    %v909 = vadd.f32 %v809, %v893
    %v910 = vadd.f32 %v810, %v894
    %v911 = vadd.f32 %v811, %v895
    %v912 = vadd.f32 %v812, %v896
    %v913 = vadd.f32 %v813, %v897
    %v914 = vadd.f32 %v814, %v898
    %v915 = vadd.f32 %v815, %v899
    %v916 = vadd.f32 %v816, %v900
    %v917 = vadd.f32 %v817, %v901
    %v918 = vadd.f32 %v818, %v902
    %v919 = vadd.f32 %v819, %v903
    %v920 = vadd.f32 %v820, %v904
    %v921 = vadd.f32 %v821, %v905
    %v922 = vadd.f32 %v822, %v906
    %v923 = vadd.f32 %v823, %v907
    %924 = vset.pattern.permute.xlu0 10
    %925 = vperm.xlu0 %924, %v82
    %v926 = vpop.permute.xlu0 %925
    %v928 = vadd.f32 %v908, %v926
    %v929 = vadd.f32 %v909, %v926
    %v930 = vadd.f32 %v910, %v926
    %v931 = vadd.f32 %v911, %v926
    %v932 = vadd.f32 %v912, %v926
    %v933 = vadd.f32 %v913, %v926
    %v934 = vadd.f32 %v914, %v926
    %v935 = vadd.f32 %v915, %v926
    %v936 = vadd.f32 %v916, %v926
    %v937 = vadd.f32 %v917, %v926
    %v938 = vadd.f32 %v918, %v926
    %v939 = vadd.f32 %v919, %v926
    %v940 = vadd.f32 %v920, %v926
    %v941 = vadd.f32 %v921, %v926
    %v942 = vadd.f32 %v922, %v926
    %v943 = vadd.f32 %v923, %v926
    %944 = vrot.lane.b32.xlu0 %v82, 127
    %v945 = vpop.permute.xlu0 %944
    %v947 = vmul.f32 %v82, %v945
    %949 = vset.pattern.permute.xlu0 11
    %950 = vperm.xlu0 %949, %v947
    %v951 = vpop.permute.xlu0 %950
    %v953 = vadd.f32 %v928, %v951
    %v954 = vadd.f32 %v929, %v951
    %v955 = vadd.f32 %v930, %v951
    %v956 = vadd.f32 %v931, %v951
    %v957 = vadd.f32 %v932, %v951
    %v958 = vadd.f32 %v933, %v951
    %v959 = vadd.f32 %v934, %v951
    %v960 = vadd.f32 %v935, %v951
    %v961 = vadd.f32 %v936, %v951
    %v962 = vadd.f32 %v937, %v951
    %v963 = vadd.f32 %v938, %v951
    %v964 = vadd.f32 %v939, %v951
    %v965 = vadd.f32 %v940, %v951
    %v966 = vadd.f32 %v941, %v951
    %v967 = vadd.f32 %v942, %v951
    %v968 = vadd.f32 %v943, %v951
    %v969 = vsub.f32 %v953, %v66
    %v970 = vsub.f32 %v954, %v67
    %v971 = vsub.f32 %v955, %v68
    %v972 = vsub.f32 %v956, %v69
    %v973 = vsub.f32 %v957, %v70
    %v974 = vsub.f32 %v958, %v71
    %v975 = vsub.f32 %v959, %v72
    %v976 = vsub.f32 %v960, %v73
    %v977 = vsub.f32 %v961, %v74
    %v978 = vsub.f32 %v962, %v75
    %v979 = vsub.f32 %v963, %v76
    %v980 = vsub.f32 %v964, %v77
    %v981 = vsub.f32 %v965, %v78
    %v982 = vsub.f32 %v966, %v79
    %v983 = vsub.f32 %v967, %v80
    %v984 = vsub.f32 %v968, %v81
    %v985 = vmul.f32 %v969, %v969
    %v986 = vmul.f32 %v970, %v970
    %v987 = vmul.f32 %v971, %v971
    %v988 = vmul.f32 %v972, %v972
    %v989 = vmul.f32 %v973, %v973
    %v990 = vmul.f32 %v974, %v974
    %v991 = vmul.f32 %v975, %v975
    %v992 = vmul.f32 %v976, %v976
    %v993 = vmul.f32 %v977, %v977
    %v994 = vmul.f32 %v978, %v978
    %v995 = vmul.f32 %v979, %v979
    %v996 = vmul.f32 %v980, %v980
    %v997 = vmul.f32 %v981, %v981
    %v998 = vmul.f32 %v982, %v982
    %v999 = vmul.f32 %v983, %v983
    %v1000 = vmul.f32 %v984, %v984
    %v1001 = vadd.f32 %v985, %v986
    %v1002 = vadd.f32 %v1001, %v987
    %v1003 = vadd.f32 %v1002, %v988
    %v1004 = vadd.f32 %v1003, %v989
    %v1005 = vadd.f32 %v1004, %v990
    %v1006 = vadd.f32 %v1005, %v991
    %v1007 = vadd.f32 %v1006, %v992
    %v1008 = vadd.f32 %v1007, %v993
    %v1009 = vadd.f32 %v1008, %v994
    %v1010 = vadd.f32 %v1009, %v995
    %v1011 = vadd.f32 %v1010, %v996
    %v1012 = vadd.f32 %v1011, %v997
    %v1013 = vadd.f32 %v1012, %v998
    %v1014 = vadd.f32 %v1013, %v999
    %v1015 = vadd.f32 %v1014, %v1000
    %1016 = vadd.xlane.f32.xlu0 %v1015
    %v1017 = vpop.xlane.xlu0 %1016
    %v1018 = vrot.slane %v1017, 4
    %v1019 = vadd.f32 %v1017, %v1018
    %v1020 = vrot.slane %v1019, 2
    %v1021 = vadd.f32 %v1019, %v1020
    %v1022 = vrot.slane %v1021, 1
    %v1023 = vadd.f32 %v1021, %v1022
    %s1024 = vtos %v1023
    %s1025 = smul.f32 %s1024, 6.1035156e-05
    %s1026 = scalar_lea.smem [#allocation8], 0
    %1027 = sst [smem:[%s1026]] %s1025
    // Predicated region
    $region26: #{tpu_custom_call.1} parent=1 // pred_check
      _
    $region27: #{tpu_custom_call.1} parent=1 // pred_check_branch
      %1029 = sbr.rel (0) target = $region29
    $region28: #{tpu_custom_call.1} parent=1 // pred_region
      %s1031 = ssub.s32 16, 16
      %1032 = vsyncadd [#allocation4], %s1031
      %1035 = dma.smem_to_hbm [#allocation8], 16, %s3, [#allocation4]
    $region29: #{tpu_custom_call.1} parent=1 // pred_fallthru
      _
    // Predicated region
    $region30: #{tpu_custom_call.1} parent=1 // pred_check
      _
    $region31: #{tpu_custom_call.1} parent=1 // pred_check_branch
      %1037 = sbr.rel (0) target = $region33
    $region32: #{tpu_custom_call.1} parent=1 // pred_region
      %1038 = dma.done [#allocation4], 16
    $region33: #{tpu_custom_call.1} parent=1 // pred_fallthru
      _
    %1039 = sfence
    %1040 = vsyncpa [#allocation3], 1
    %1041 = vsyncpa [#allocation6], 1
    %1042 = vsyncpa [#allocation4], 1

</llo_original>
